<compile_context>
chip_gen: v5e
topology: v5e:2x2
jax: 0.10.0
libtpu: 0.0.40
codegen_flags: <defaults>
</compile_context>

<pallas_src>
import functools

import jax
import jax.numpy as jnp
import numpy as np
from jax import lax
from jax.experimental import pallas as pl
from jax.experimental.pallas import tpu as pltpu

GROUPS = 16
EPS = 1e-6


def _pick_tile(n, align, target):
    """Largest divisor of n that is a multiple of `align` and <= target; else n (full)."""
    if n % align != 0:
        return n
    best = align
    t = align
    limit = min(n, max(align, target))
    while t <= limit:
        if n % t == 0:
            best = t
        t += align
    return best


def _vmem_limit_bytes():
    # ~48 MiB on v7x (64 MiB physical), ~96 MiB on v5e/v6e (128 MiB physical).
    try:
        cap = getattr(pltpu.get_tpu_info(), "vmem_capacity_bytes", None)
        if not cap:
            cap = 64 * 1024 * 1024
    except Exception:
        cap = 64 * 1024 * 1024
    return int(min(cap * 3 // 4, 100 * 1024 * 1024))


# ---------------------------------------------------------------------------
# Kernel 1: GroupNorm statistics -> per-channel scale/shift (gamma/beta folded in)
# ---------------------------------------------------------------------------
def _gn_stats_kernel(x_ref, m_ref, mt_ref, gamma_ref, beta_ref,
                     scale_ref, shift_ref, sum_sc, sq_sc, *, group_count):
    ni = pl.program_id(1)

    @pl.when(ni == 0)
    def _():
        sum_sc[...] = jnp.zeros_like(sum_sc)
        sq_sc[...] = jnp.zeros_like(sq_sc)

    x = x_ref[0].astype(jnp.float32)                       # (tn, C)
    sum_sc[...] += jnp.sum(x, axis=0, keepdims=True)       # (1, C)
    sq_sc[...] += jnp.sum(x * x, axis=0, keepdims=True)    # (1, C)

    @pl.when(ni == pl.num_programs(1) - 1)
    def _():
        M = m_ref[...]                                      # (C, G) group membership
        Mt = mt_ref[...]                                    # (G, C)
        g_sum = jnp.dot(sum_sc[...], M, preferred_element_type=jnp.float32)   # (1, G)
        g_sq = jnp.dot(sq_sc[...], M, preferred_element_type=jnp.float32)     # (1, G)
        g_mean = g_sum / group_count
        # clamp: E[x^2]-E[x]^2 can cancel to a tiny negative number
        g_var = jnp.maximum(g_sq / group_count - g_mean * g_mean, 0.0)
        g_inv = lax.rsqrt(g_var + EPS)
        mean_c = jnp.dot(g_mean, Mt, preferred_element_type=jnp.float32)      # (1, C)
        inv_c = jnp.dot(g_inv, Mt, preferred_element_type=jnp.float32)        # (1, C)
        sc = inv_c * gamma_ref[...]
        scale_ref[0] = sc
        shift_ref[0] = beta_ref[...] - mean_c * sc


# ---------------------------------------------------------------------------
# Kernel 2: normalize + 1x1 q/k/v convolutions (tiled over spatial positions)
# ---------------------------------------------------------------------------
def _norm_qkv_kernel(x_ref, scale_ref, shift_ref,
                     wq_ref, bq_ref, wk_ref, bk_ref, wv_ref, bv_ref,
                     q_ref, kt_ref, v_ref):
    x = x_ref[0].astype(jnp.float32)                                  # (tn, C)
    h = (x * scale_ref[0] + shift_ref[0]).astype(jnp.bfloat16)        # f32 norm, bf16 MXU feed

    q = jnp.dot(h, wq_ref[...], preferred_element_type=jnp.float32) + bq_ref[...]
    q_ref[0] = q.astype(jnp.bfloat16)                                 # scale already folded in

    k = jnp.dot(h, wk_ref[...], preferred_element_type=jnp.float32) + bk_ref[...]
    kt_ref[0] = k.T.astype(jnp.bfloat16)                              # (C, tn), one XLU transpose

    v = jnp.dot(h, wv_ref[...], preferred_element_type=jnp.float32) + bv_ref[...]
    v_ref[0] = v.astype(jnp.bfloat16)


# ---------------------------------------------------------------------------
# Kernel 3: flash-style attention (online softmax) + proj_out + residual
# ---------------------------------------------------------------------------
def _flash_attn_proj_kernel(x_ref, q_ref, kt_ref, v_ref, wp_ref, bp_ref,
                            o_ref, m_sc, l_sc, acc_sc):
    ki = pl.program_id(2)

    @pl.when(ki == 0)
    def _():
        m_sc[...] = jnp.full_like(m_sc, -jnp.inf)
        l_sc[...] = jnp.zeros_like(l_sc)
        acc_sc[...] = jnp.zeros_like(acc_sc)

    # q is pre-scaled by 1/sqrt(C); bf16 x bf16 -> f32 on the MXU.
    s = jnp.dot(q_ref[0], kt_ref[0], preferred_element_type=jnp.float32)     # (tq, tk)

    m_prev = m_sc[...]
    m_new = jnp.maximum(m_prev, jnp.max(s, axis=-1, keepdims=True))
    alpha = jnp.exp(m_prev - m_new)
    p = jnp.exp(s - m_new)
    l_sc[...] = alpha * l_sc[...] + jnp.sum(p, axis=-1, keepdims=True)
    acc_sc[...] = alpha * acc_sc[...] + jnp.dot(
        p.astype(jnp.bfloat16), v_ref[0], preferred_element_type=jnp.float32)
    m_sc[...] = m_new

    @pl.when(ki == pl.num_programs(2) - 1)
    def _():
        attn = acc_sc[...] * pl.reciprocal(l_sc[...], approx=True)           # (tq, C)
        proj = jnp.dot(attn.astype(jnp.bfloat16), wp_ref[...],
                       preferred_element_type=jnp.float32) + bp_ref[...]
        o_ref[0] = (x_ref[0].astype(jnp.float32) + proj).astype(o_ref.dtype)


# ---------------------------------------------------------------------------
# Wrapper
# ---------------------------------------------------------------------------
def attn_block(x_nchw, params):
    B, C, H, W = x_nchw.shape
    assert C % GROUPS == 0, "GroupNorm(16 groups) needs C % 16 == 0"
    N = H * W
    cg = C // GROUPS
    out_dtype = x_nchw.dtype
    f32, bf16 = jnp.float32, jnp.bfloat16

    x = jnp.transpose(x_nchw, (0, 2, 3, 1)).reshape(B, N, C)   # channels last (lane dim)

    # Tile sizes (divisors of N; lane-dim tiles are multiples of 128 when possible).
    tn = _pick_tile(N, 128, 512)                        # norm/qkv spatial tile
    tq = _pick_tile(N, 8, max(8, min(256, N // 2)))     # query tile
    tk = _pick_tile(N, 128, 512)                        # kv tile
    n_tiles, nq, nk = N // tn, N // tq, N // tk

    attn_scale = float(C) ** -0.5

    gamma = params["gamma"].reshape(1, C).astype(f32)
    beta = params["beta"].reshape(1, C).astype(f32)
    # weights transposed to (C_in, C_out); attention scale folded into q's weight+bias
    wq_t = (params["wq"].T * attn_scale).astype(bf16)
    bq = (params["bq"] * attn_scale).reshape(1, C).astype(f32)
    wk_t = params["wk"].T.astype(bf16)
    bk = params["bk"].reshape(1, C).astype(f32)
    wv_t = params["wv"].T.astype(bf16)
    bv = params["bv"].reshape(1, C).astype(f32)
    wp_t = params["wp"].T.astype(bf16)
    bp = params["bp"].reshape(1, C).astype(f32)

    # group membership matrix: M[c, g] = 1 if channel c belongs to group g
    M = jnp.repeat(jnp.eye(GROUPS, dtype=f32), cg, axis=0)       # (C, G)
    Mt = M.T                                                     # (G, C)

    vmem = _vmem_limit_bytes()

    # ---- kernel 1: GroupNorm stats -> per-channel scale/shift ----
    scale_c, shift_c = pl.pallas_call(
        functools.partial(_gn_stats_kernel, group_count=float(N * cg)),
        out_shape=(jax.ShapeDtypeStruct((B, 1, C), f32),
                   jax.ShapeDtypeStruct((B, 1, C), f32)),
        grid_spec=pltpu.PrefetchScalarGridSpec(
            num_scalar_prefetch=0,
            grid=(B, n_tiles),
            in_specs=[
                pl.BlockSpec((1, tn, C), lambda b, i: (b, i, 0)),
                pl.BlockSpec((C, GROUPS), lambda b, i: (0, 0)),
                pl.BlockSpec((GROUPS, C), lambda b, i: (0, 0)),
                pl.BlockSpec((1, C), lambda b, i: (0, 0)),
                pl.BlockSpec((1, C), lambda b, i: (0, 0)),
            ],
            out_specs=[
                pl.BlockSpec((1, 1, C), lambda b, i: (b, 0, 0)),
                pl.BlockSpec((1, 1, C), lambda b, i: (b, 0, 0)),
            ],
            scratch_shapes=[pltpu.VMEM((1, C), f32), pltpu.VMEM((1, C), f32)],
        ),
        compiler_params=pltpu.CompilerParams(
            dimension_semantics=("parallel", "arbitrary"),
            vmem_limit_bytes=vmem),
    )(x, M, Mt, gamma, beta)

    # ---- kernel 2: normalize + q/k/v 1x1 convs (q scaled, k transposed, bf16 outputs) ----
    q, kt, v = pl.pallas_call(
        _norm_qkv_kernel,
        out_shape=(jax.ShapeDtypeStruct((B, N, C), bf16),
                   jax.ShapeDtypeStruct((B, C, N), bf16),
                   jax.ShapeDtypeStruct((B, N, C), bf16)),
        grid_spec=pltpu.PrefetchScalarGridSpec(
            num_scalar_prefetch=0,
            grid=(B, n_tiles),
            in_specs=[
                pl.BlockSpec((1, tn, C), lambda b, i: (b, i, 0)),   # x
                pl.BlockSpec((1, 1, C), lambda b, i: (b, 0, 0)),    # scale
                pl.BlockSpec((1, 1, C), lambda b, i: (b, 0, 0)),    # shift
                pl.BlockSpec((C, C), lambda b, i: (0, 0)),          # wq
                pl.BlockSpec((1, C), lambda b, i: (0, 0)),          # bq
                pl.BlockSpec((C, C), lambda b, i: (0, 0)),          # wk
                pl.BlockSpec((1, C), lambda b, i: (0, 0)),          # bk
                pl.BlockSpec((C, C), lambda b, i: (0, 0)),          # wv
                pl.BlockSpec((1, C), lambda b, i: (0, 0)),          # bv
            ],
            out_specs=[
                pl.BlockSpec((1, tn, C), lambda b, i: (b, i, 0)),   # q (scaled)
                pl.BlockSpec((1, C, tn), lambda b, i: (b, 0, i)),   # k^T
                pl.BlockSpec((1, tn, C), lambda b, i: (b, i, 0)),   # v
            ],
        ),
        compiler_params=pltpu.CompilerParams(
            dimension_semantics=("parallel", "parallel"),
            vmem_limit_bytes=vmem),
    )(x, scale_c, shift_c, wq_t, bq, wk_t, bk, wv_t, bv)

    # ---- kernel 3: flash attention + proj_out + residual ----
    out = pl.pallas_call(
        _flash_attn_proj_kernel,
        out_shape=jax.ShapeDtypeStruct((B, N, C), out_dtype),
        grid_spec=pltpu.PrefetchScalarGridSpec(
            num_scalar_prefetch=0,
            grid=(B, nq, nk),
            in_specs=[
                pl.BlockSpec((1, tq, C), lambda b, qi, ki: (b, qi, 0)),   # x (residual)
                pl.BlockSpec((1, tq, C), lambda b, qi, ki: (b, qi, 0)),   # q
                pl.BlockSpec((1, C, tk), lambda b, qi, ki: (b, 0, ki)),   # k^T
                pl.BlockSpec((1, tk, C), lambda b, qi, ki: (b, ki, 0)),   # v
                pl.BlockSpec((C, C), lambda b, qi, ki: (0, 0)),           # wp
                pl.BlockSpec((1, C), lambda b, qi, ki: (0, 0)),           # bp
            ],
            out_specs=pl.BlockSpec((1, tq, C), lambda b, qi, ki: (b, qi, 0)),
            scratch_shapes=[
                pltpu.VMEM((tq, 1), f32),    # running max
                pltpu.VMEM((tq, 1), f32),    # running sum
                pltpu.VMEM((tq, C), f32),    # output accumulator
            ],
        ),
        compiler_params=pltpu.CompilerParams(
            dimension_semantics=("parallel", "parallel", "arbitrary"),
            vmem_limit_bytes=vmem),
    )(x, q, kt, v, wp_t, bp)

    return jnp.transpose(out.reshape(B, H, W, C), (0, 3, 1, 2))


# ---------------------------------------------------------------------------
# Pure-JAX reference (mirrors the PyTorch forward, NCHW, f32)
# ---------------------------------------------------------------------------
def ref_attn_block(x, params):
    B, C, H, W = x.shape
    cg = C // GROUPS
    xg = x.reshape(B, GROUPS, cg, H, W)
    mean = xg.mean(axis=(2, 3, 4), keepdims=True)
    var = xg.var(axis=(2, 3, 4), keepdims=True)
    h = ((xg - mean) / jnp.sqrt(var + EPS)).reshape(B, C, H, W)
    h = h * params["gamma"].reshape(1, C, 1, 1) + params["beta"].reshape(1, C, 1, 1)

    def conv1x1(t, w, b):
        return jnp.einsum("bchw,oc->bohw", t, w) + b.reshape(1, -1, 1, 1)

    q = conv1x1(h, params["wq"], params["bq"]).reshape(B, C, H * W)
    k = conv1x1(h, params["wk"], params["bk"]).reshape(B, C, H * W)
    v = conv1x1(h, params["wv"], params["bv"]).reshape(B, C, H * W)
    w_ = jnp.einsum("bci,bcj->bij", q, k) * (C ** -0.5)
    w_ = jax.nn.softmax(w_, axis=2)
    h_ = jnp.einsum("bcj,bij->bci", v, w_).reshape(B, C, H, W)
    h_ = conv1x1(h_, params["wp"], params["bp"])
    return x + h_


def make_params(key, C):
    ks = jax.random.split(key, 10)
    s = 0.1
    return {
        "gamma": 1.0 + s * jax.random.normal(ks[0], (C,), jnp.float32),
        "beta": s * jax.random.normal(ks[1], (C,), jnp.float32),
        "wq": s * jax.random.normal(ks[2], (C, C), jnp.float32),
        "bq": s * jax.random.normal(ks[3], (C,), jnp.float32),
        "wk": s * jax.random.normal(ks[4], (C, C), jnp.float32),
        "bk": s * jax.random.normal(ks[5], (C,), jnp.float32),
        "wv": s * jax.random.normal(ks[6], (C, C), jnp.float32),
        "bv": s * jax.random.normal(ks[7], (C,), jnp.float32),
        "wp": s * jax.random.normal(ks[8], (C, C), jnp.float32),
        "bp": s * jax.random.normal(ks[9], (C,), jnp.float32),
    }


if __name__ == "__main__":
    key = jax.random.PRNGKey(0)
    # (B, C, H, W): small test + a slightly larger one that exercises the
    # multi-step online-softmax path (nk > 1) and multiple query tiles.
    for (B, C, H, W) in [(2, 32, 16, 16), (1, 64, 32, 32)]:
        key, kx, kp = jax.random.split(key, 3)
        x = jax.random.normal(kx, (B, C, H, W), jnp.float32)
        params = make_params(kp, C)

        out = jax.block_until_ready(attn_block(x, params))
        ref = jax.block_until_ready(ref_attn_block(x, params))

        # bf16 MXU operands (f32 accumulation) -> slightly looser tolerance than pure f32
        if not np.allclose(np.asarray(out), np.asarray(ref), rtol=2e-2, atol=2e-2):
            diff = float(np.max(np.abs(np.asarray(out) - np.asarray(ref))))
            raise AssertionError(
                f"Pallas AttnBlock mismatch for shape {(B, C, H, W)}: max |diff| = {diff}")
    print("KERNEL_OK")
</pallas_src>

<mosaic_0001>
module attributes {stable_mosaic.version = 11 : i64} {
  func.func @_gn_stats_kernel(%arg0: i32, %arg1: i32, %arg2: memref<1x256x32xf32, #tpu.memory_space<vmem>>, %arg3: memref<32x16xf32, #tpu.memory_space<vmem>>, %arg4: memref<16x32xf32, #tpu.memory_space<vmem>>, %arg5: memref<1x32xf32, #tpu.memory_space<vmem>>, %arg6: memref<1x32xf32, #tpu.memory_space<vmem>>, %arg7: memref<1x1x32xf32, #tpu.memory_space<vmem>>, %arg8: memref<1x1x32xf32, #tpu.memory_space<vmem>>, %arg9: memref<1x32xf32, #tpu.memory_space<vmem>>, %arg10: memref<1x32xf32, #tpu.memory_space<vmem>>) attributes {dimension_semantics = [#tpu.dimension_semantics<parallel>, #tpu.dimension_semantics<arbitrary>], iteration_bounds = array<i64: 2, 1>, scalar_prefetch = 0 : i64, scratch_operands = 2 : i64, tpu.core_type = #tpu.core_type<tc>, window_params = [{transform_indices = @transform_0, window_bounds = array<i64: 1, 256, 32>}, {pipeline_mode = #tpu.pipeline_mode<synchronous>, transform_indices = @transform_1, window_bounds = array<i64: 32, 16>}, {pipeline_mode = #tpu.pipeline_mode<synchronous>, transform_indices = @transform_2, window_bounds = array<i64: 16, 32>}, {pipeline_mode = #tpu.pipeline_mode<synchronous>, transform_indices = @transform_3, window_bounds = array<i64: 1, 32>}, {pipeline_mode = #tpu.pipeline_mode<synchronous>, transform_indices = @transform_4, window_bounds = array<i64: 1, 32>}, {transform_indices = @transform_5, window_bounds = array<i64: 1, 1, 32>}, {transform_indices = @transform_6, window_bounds = array<i64: 1, 1, 32>}]} {
    %c0_i32 = arith.constant 0 : i32
    %0 = arith.cmpi eq, %arg1, %c0_i32 : i32
    %1 = arith.extui %0 : i1 to i32
    %c0_i32_0 = arith.constant 0 : i32
    %2 = arith.cmpi ne, %1, %c0_i32_0 : i32
    scf.if %2 {
      %cst_14 = arith.constant 0.000000e+00 : f32
      %19 = vector.broadcast %cst_14 : f32 to vector<1x32xf32>
      %c0_15 = arith.constant 0 : index
      %c0_16 = arith.constant 0 : index
      %20 = vector.load %arg9[%c0_15, %c0_16] : memref<1x32xf32, #tpu.memory_space<vmem>>, vector<1x32xf32>
      tpu.vector_store %arg9[%c0_15, %c0_16], %19 {strides = array<i32>} : memref<1x32xf32, #tpu.memory_space<vmem>>, vector<1x32xf32>,
      %cst_17 = arith.constant 0.000000e+00 : f32
      %21 = vector.broadcast %cst_17 : f32 to vector<1x32xf32>
      %c0_18 = arith.constant 0 : index
      %c0_19 = arith.constant 0 : index
      %22 = vector.load %arg10[%c0_18, %c0_19] : memref<1x32xf32, #tpu.memory_space<vmem>>, vector<1x32xf32>
      tpu.vector_store %arg10[%c0_18, %c0_19], %21 {strides = array<i32>} : memref<1x32xf32, #tpu.memory_space<vmem>>, vector<1x32xf32>,
    } else {
    }
    %c0 = arith.constant 0 : index
    %c0_1 = arith.constant 0 : index
    %c0_2 = arith.constant 0 : index
    %3 = vector.load %arg2[%c0, %c0_1, %c0_2] : memref<1x256x32xf32, #tpu.memory_space<vmem>>, vector<1x256x32xf32>
    %4 = vector.shape_cast %3 : vector<1x256x32xf32> to vector<256x32xf32>
    %c0_3 = arith.constant 0 : index
    %c0_4 = arith.constant 0 : index
    %5 = vector.load %arg9[%c0_3, %c0_4] : memref<1x32xf32, #tpu.memory_space<vmem>>, vector<1x32xf32>
    %cst = arith.constant dense<0.000000e+00> : vector<32xf32>
    %6 = vector.multi_reduction <add>, %4, %cst [0] : vector<256x32xf32> to vector<32xf32>
    %7 = vector.shape_cast %6 : vector<32xf32> to vector<1x32xf32>
    %8 = arith.addf %5, %7 : vector<1x32xf32>
    %c0_5 = arith.constant 0 : index
    %c0_6 = arith.constant 0 : index
    %9 = vector.load %arg9[%c0_5, %c0_6] : memref<1x32xf32, #tpu.memory_space<vmem>>, vector<1x32xf32>
    tpu.vector_store %arg9[%c0_5, %c0_6], %8 {strides = array<i32>} : memref<1x32xf32, #tpu.memory_space<vmem>>, vector<1x32xf32>,
    %c0_7 = arith.constant 0 : index
    %c0_8 = arith.constant 0 : index
    %10 = vector.load %arg10[%c0_7, %c0_8] : memref<1x32xf32, #tpu.memory_space<vmem>>, vector<1x32xf32>
    %11 = arith.mulf %4, %4 : vector<256x32xf32>
    %cst_9 = arith.constant dense<0.000000e+00> : vector<32xf32>
    %12 = vector.multi_reduction <add>, %11, %cst_9 [0] : vector<256x32xf32> to vector<32xf32>
    %13 = vector.shape_cast %12 : vector<32xf32> to vector<1x32xf32>
    %14 = arith.addf %10, %13 : vector<1x32xf32>
    %c0_10 = arith.constant 0 : index
    %c0_11 = arith.constant 0 : index
    %15 = vector.load %arg10[%c0_10, %c0_11] : memref<1x32xf32, #tpu.memory_space<vmem>>, vector<1x32xf32>
    tpu.vector_store %arg10[%c0_10, %c0_11], %14 {strides = array<i32>} : memref<1x32xf32, #tpu.memory_space<vmem>>, vector<1x32xf32>,
    %c0_i32_12 = arith.constant 0 : i32
    %16 = arith.cmpi eq, %arg1, %c0_i32_12 : i32
    %17 = arith.extui %16 : i1 to i32
    %c0_i32_13 = arith.constant 0 : i32
    %18 = arith.cmpi ne, %17, %c0_i32_13 : i32
    scf.if %18 {
      %c0_14 = arith.constant 0 : index
      %c0_15 = arith.constant 0 : index
      %19 = vector.load %arg3[%c0_14, %c0_15] : memref<32x16xf32, #tpu.memory_space<vmem>>, vector<32x16xf32>
      %c0_16 = arith.constant 0 : index
      %c0_17 = arith.constant 0 : index
      %20 = vector.load %arg4[%c0_16, %c0_17] : memref<16x32xf32, #tpu.memory_space<vmem>>, vector<16x32xf32>
      %c0_18 = arith.constant 0 : index
      %c0_19 = arith.constant 0 : index
      %21 = vector.load %arg9[%c0_18, %c0_19] : memref<1x32xf32, #tpu.memory_space<vmem>>, vector<1x32xf32>
      %cst_20 = arith.constant dense<0.000000e+00> : vector<1x16xf32>
      %22 = tpu.matmul %21, %19, %cst_20 {dimension_numbers = #tpu.dot_dimension_numbers<[1], [0], [0], [1], [0, 0, 1, 1], [], []>} : vector<1x32xf32>, vector<32x16xf32>, vector<1x16xf32> -> vector<1x16xf32>
      %c0_21 = arith.constant 0 : index
      %c0_22 = arith.constant 0 : index
      %23 = vector.load %arg10[%c0_21, %c0_22] : memref<1x32xf32, #tpu.memory_space<vmem>>, vector<1x32xf32>
      %cst_23 = arith.constant dense<0.000000e+00> : vector<1x16xf32>
      %24 = tpu.matmul %23, %19, %cst_23 {dimension_numbers = #tpu.dot_dimension_numbers<[1], [0], [0], [1], [0, 0, 1, 1], [], []>} : vector<1x32xf32>, vector<32x16xf32>, vector<1x16xf32> -> vector<1x16xf32>
      %cst_24 = arith.constant 5.120000e+02 : f32
      %25 = vector.broadcast %cst_24 : f32 to vector<1x16xf32>
      %26 = arith.divf %22, %25 : vector<1x16xf32>
      %cst_25 = arith.constant 5.120000e+02 : f32
      %27 = vector.broadcast %cst_25 : f32 to vector<1x16xf32>
      %28 = arith.divf %24, %27 : vector<1x16xf32>
      %29 = arith.mulf %26, %26 : vector<1x16xf32>
      %30 = arith.subf %28, %29 : vector<1x16xf32>
      %cst_26 = arith.constant 0.000000e+00 : f32
      %31 = vector.broadcast %cst_26 : f32 to vector<1x16xf32>
      %32 = arith.maximumf %30, %31 : vector<1x16xf32>
      %cst_27 = arith.constant 9.99999997E-7 : f32
      %33 = vector.broadcast %cst_27 : f32 to vector<1x16xf32>
      %34 = arith.addf %32, %33 : vector<1x16xf32>
      %35 = math.rsqrt %34 : vector<1x16xf32>
      %cst_28 = arith.constant dense<0.000000e+00> : vector<1x32xf32>
      %36 = tpu.matmul %26, %20, %cst_28 {dimension_numbers = #tpu.dot_dimension_numbers<[1], [0], [0], [1], [0, 0, 1, 1], [], []>} : vector<1x16xf32>, vector<16x32xf32>, vector<1x32xf32> -> vector<1x32xf32>
      %cst_29 = arith.constant dense<0.000000e+00> : vector<1x32xf32>
      %37 = tpu.matmul %35, %20, %cst_29 {dimension_numbers = #tpu.dot_dimension_numbers<[1], [0], [0], [1], [0, 0, 1, 1], [], []>} : vector<1x16xf32>, vector<16x32xf32>, vector<1x32xf32> -> vector<1x32xf32>
      %c0_30 = arith.constant 0 : index
      %c0_31 = arith.constant 0 : index
      %38 = vector.load %arg5[%c0_30, %c0_31] : memref<1x32xf32, #tpu.memory_space<vmem>>, vector<1x32xf32>
      %39 = arith.mulf %37, %38 : vector<1x32xf32>
      %c0_32 = arith.constant 0 : index
      %c0_33 = arith.constant 0 : index
      %c0_34 = arith.constant 0 : index
      %40 = vector.load %arg7[%c0_32, %c0_33, %c0_34] : memref<1x1x32xf32, #tpu.memory_space<vmem>>, vector<1x1x32xf32>
      %41 = vector.shape_cast %40 : vector<1x1x32xf32> to vector<1x32xf32>
      %42 = vector.shape_cast %39 : vector<1x32xf32> to vector<1x1x32xf32>
      tpu.vector_store %arg7[%c0_32, %c0_33, %c0_34], %42 {strides = array<i32>} : memref<1x1x32xf32, #tpu.memory_space<vmem>>, vector<1x1x32xf32>,
      %c0_35 = arith.constant 0 : index
      %c0_36 = arith.constant 0 : index
      %43 = vector.load %arg6[%c0_35, %c0_36] : memref<1x32xf32, #tpu.memory_space<vmem>>, vector<1x32xf32>
      %44 = arith.mulf %36, %39 : vector<1x32xf32>
      %45 = arith.subf %43, %44 : vector<1x32xf32>
      %c0_37 = arith.constant 0 : index
      %c0_38 = arith.constant 0 : index
      %c0_39 = arith.constant 0 : index
      %46 = vector.load %arg8[%c0_37, %c0_38, %c0_39] : memref<1x1x32xf32, #tpu.memory_space<vmem>>, vector<1x1x32xf32>
      %47 = vector.shape_cast %46 : vector<1x1x32xf32> to vector<1x32xf32>
      %48 = vector.shape_cast %45 : vector<1x32xf32> to vector<1x1x32xf32>
      tpu.vector_store %arg8[%c0_37, %c0_38, %c0_39], %48 {strides = array<i32>} : memref<1x1x32xf32, #tpu.memory_space<vmem>>, vector<1x1x32xf32>,
    } else {
    }
    return
  }
  func.func @transform_0(%arg0: i32, %arg1: i32) -> (i32, i32, i32) {
    %c0_i32 = arith.constant 0 : i32
    %c0_i32_0 = arith.constant 0 : i32
    return %arg0, %arg1, %c0_i32 : i32, i32, i32
  }
  func.func @transform_1(%arg0: i32, %arg1: i32) -> (i32, i32) {
    %c0_i32 = arith.constant 0 : i32
    %c0_i32_0 = arith.constant 0 : i32
    %c0_i32_1 = arith.constant 0 : i32
    return %c0_i32, %c0_i32_0 : i32, i32
  }
  func.func @transform_2(%arg0: i32, %arg1: i32) -> (i32, i32) {
    %c0_i32 = arith.constant 0 : i32
    %c0_i32_0 = arith.constant 0 : i32
    %c0_i32_1 = arith.constant 0 : i32
    return %c0_i32, %c0_i32_0 : i32, i32
  }
  func.func @transform_3(%arg0: i32, %arg1: i32) -> (i32, i32) {
    %c0_i32 = arith.constant 0 : i32
    %c0_i32_0 = arith.constant 0 : i32
    %c0_i32_1 = arith.constant 0 : i32
    return %c0_i32, %c0_i32_0 : i32, i32
  }
  func.func @transform_4(%arg0: i32, %arg1: i32) -> (i32, i32) {
    %c0_i32 = arith.constant 0 : i32
    %c0_i32_0 = arith.constant 0 : i32
    %c0_i32_1 = arith.constant 0 : i32
    return %c0_i32, %c0_i32_0 : i32, i32
  }
  func.func @transform_5(%arg0: i32, %arg1: i32) -> (i32, i32, i32) {
    %c0_i32 = arith.constant 0 : i32
    %c0_i32_0 = arith.constant 0 : i32
    %c0_i32_1 = arith.constant 0 : i32
    return %arg0, %c0_i32, %c0_i32_0 : i32, i32, i32
  }
  func.func @transform_6(%arg0: i32, %arg1: i32) -> (i32, i32, i32) {
    %c0_i32 = arith.constant 0 : i32
    %c0_i32_0 = arith.constant 0 : i32
    %c0_i32_1 = arith.constant 0 : i32
    return %arg0, %c0_i32, %c0_i32_0 : i32, i32, i32
  }
}

</mosaic_0001>

<llo_original>
// kernel: tpu_custom_call.1
$region0: #{tpu_custom_call.1}
  #allocation0 [shape = 'u32[]', space=smem, size = 0x4, offset = 0x4, fixed_abs, tag = 'smem constant byte address 0x4 - core index']
  #allocation1 [shape = 'u32[72,128]{1,0:T(1,128)}', space=vmem, size = 0x9000, scoped, tag = 'internal scratch']
  #allocation2 [shape = 'f32[1,32]{1,0:T(1,128)}', space=vmem, size = 0x200, scoped, tag = 'scratch operand']
  #allocation3 [shape = 'f32[1,32]{1,0:T(1,128)}', space=vmem, size = 0x200, scoped, tag = 'scratch operand']
  %s0 = inlined_call_operand.vmem [shape: f32[2,256,32], index: 0, kind: input, shape index: {}]
  %s1 = inlined_call_operand.vmem [shape: f32[32,16], index: 1, kind: input, shape index: {}]
  %s2 = inlined_call_operand.vmem [shape: f32[16,32], index: 2, kind: input, shape index: {}]
  %s3 = inlined_call_operand.vmem [shape: f32[1,32], index: 3, kind: input, shape index: {}]
  %s4 = inlined_call_operand.vmem [shape: f32[1,32], index: 4, kind: input, shape index: {}]
  %s5 = inlined_call_operand.hbm [shape: f32[2,1,32], index: 5, kind: output, shape index: {0}]
  %s6 = inlined_call_operand.hbm [shape: f32[2,1,32], index: 6, kind: output, shape index: {1}]
  %7 = xla_tuple %s5, %s6
  %s8 = sld [smem:[#allocation0]]
  $region69: #{tpu_custom_call.1} parent=0
    _
  %s10 = ssub.s32 1, %s8
  %s11 = scalar_select 0, %s10, %s8
  $region1: #{tpu_custom_call.1} parent=0
    #allocation4 [shape = 'u8[1024]{0}', space=vmem, size = 0x400, scoped, tag = 'output window, operand 0']
    #allocation5 [shape = 's32[2]{0}', space=sflag, size = 0x8, scoped, tag = 'scoped memory for tpu_custom_call.1']
    #allocation6 [shape = 'u8[1024]{0}', space=vmem, size = 0x400, scoped, tag = 'output window, operand 1']
    #allocation7 [shape = 's32[2]{0}', space=sflag, size = 0x8, scoped, tag = 'scoped memory for tpu_custom_call.1']
    %12 = vsyncpa [#allocation5], 0
    %s13 = scalar_lea.sflag [#allocation5], 1
    %14 = vsyncpa %s13, 0
    %15 = vsyncpa [#allocation7], 0
    %s16 = scalar_lea.sflag [#allocation7], 1
    %17 = vsyncpa %s16, 0
    loop: start=0, step=1, limit=4
    $region2: #{tpu_custom_call.1} parent=1 // loop_pre_header
      _
    $region3: #{tpu_custom_call.1} parent=1 // loop_header
      %s19 = sphi 0, %s23
      %p20 = scmp.ge.s32.totalorder %s19, 4
      %s26 = sphi 0, %s38
      %s27 = sphi 0, %s34
      %s28 = sphi 0, %s26
      %s29 = sphi 0, %s27
      %s30 = sphi 0, %s28
      %s31 = sphi 0, %s29
      %s43 = sphi 0, %s45
      %s46 = sphi 0, %s43
      %s47 = sphi 0, %s46
      %s63 = sphi 0, %s47
      %s67 = sphi 0, %s67
      %s69 = sphi 0, %s67
      %s70 = sphi 0, %s69
      %s84 = sphi 0, %s70
      %s88 = sphi 0, %s88
      %s90 = sphi 0, %s88
      %s91 = sphi 0, %s90
      %s105 = sphi 0, %s91
      %s109 = sphi 0, %s109
      %s111 = sphi 0, %s109
      %s112 = sphi 0, %s111
      %s126 = sphi 0, %s112
      %s130 = sphi 0, %s130
      %s132 = sphi 0, %s130
      %s133 = sphi 0, %s132
      %s147 = sphi 0, %s133
      %s153 = sphi 0, %s155
      %s156 = sphi 0, %s153
      %s157 = sphi 0, %s156
      %s173 = sphi 0, %s157
      %s179 = sphi 0, %s181
      %s182 = sphi 0, %s179
      %s183 = sphi 0, %s182
      %s199 = sphi 0, %s183
    $region4: #{tpu_custom_call.1} parent=1 // loop_header_branch
      %22 = sbr.rel (%p20) target = $region8
    $region5: #{tpu_custom_call.1} parent=1 // loop_body
      %s24 = ssub.s32 %s19, 1
      %s25 = ssub.s32 %s19, 2
      %s32 = sadd.s32 1, %s27
      %p33 = scmp.ge.s32.totalorder %s32, 1
      %s34 = scalar_select %p33, 0, %s32
      %s35 = sadd.s32 1, %s26
      %s36 = scalar_select %p33, %s35, %s26
      %p37 = scmp.ge.s32.totalorder %s36, 2
      %s38 = scalar_select %p37, 0, %s36
      %s39 = ssub.s32 %s26, %s38
      %s40 = ssub.s32 %s27, %s34
      %s41 = sor.u32 %s39, %s40
      %p42 = scmp.eq.s32.totalorder %s41, 0
      %s44 = sadd.s32 %s43, 1
      %s45 = scalar_select %p42, %s43, %s44
      %p48 = pneg %p42
      %p49 = scmp.eq.s32.totalorder %s19, 1
      %p50 = por %p48, %p49
      %p51 = scmp.ne.s32.totalorder %s43, %s46
      %p52 = scmp.eq.s32.totalorder %s19, 0
      %p53 = por %p51, %p52
      %p54 = scmp.ne.s32.totalorder %s43, %s46
      %p55 = scmp.eq.s32.totalorder %s24, 1
      %p56 = por %p54, %p55
      %p57 = scmp.ne.s32.totalorder %s46, %s47
      %p58 = scmp.eq.s32.totalorder %s24, 0
      %p59 = por %p57, %p58
      %p60 = scmp.ne.s32.totalorder %s46, %s47
      %p61 = scmp.eq.s32.totalorder %s25, 1
      %p62 = por %p60, %p61
      %p64 = scmp.ne.s32.totalorder %s47, %s63
      %p65 = scmp.eq.s32.totalorder %s25, 0
      %p66 = por %p64, %p65
      %s68 = sadd.s32 %s67, 1
      %p71 = scmp.eq.s32.totalorder %s19, 1
      %p72 = scmp.ne.s32.totalorder %s67, %s69
      %p73 = scmp.eq.s32.totalorder %s19, 0
      %p74 = por %p72, %p73
      %p75 = scmp.ne.s32.totalorder %s67, %s69
      %p76 = scmp.eq.s32.totalorder %s24, 1
      %p77 = por %p75, %p76
      %p78 = scmp.ne.s32.totalorder %s69, %s70
      %p79 = scmp.eq.s32.totalorder %s24, 0
      %p80 = por %p78, %p79
      %p81 = scmp.ne.s32.totalorder %s69, %s70
      %p82 = scmp.eq.s32.totalorder %s25, 1
      %p83 = por %p81, %p82
      %p85 = scmp.ne.s32.totalorder %s70, %s84
      %p86 = scmp.eq.s32.totalorder %s25, 0
      %p87 = por %p85, %p86
      %s89 = sadd.s32 %s88, 1
      %p92 = scmp.eq.s32.totalorder %s19, 1
      %p93 = scmp.ne.s32.totalorder %s88, %s90
      %p94 = scmp.eq.s32.totalorder %s19, 0
      %p95 = por %p93, %p94
      %p96 = scmp.ne.s32.totalorder %s88, %s90
      %p97 = scmp.eq.s32.totalorder %s24, 1
      %p98 = por %p96, %p97
      %p99 = scmp.ne.s32.totalorder %s90, %s91
      %p100 = scmp.eq.s32.totalorder %s24, 0
      %p101 = por %p99, %p100
      %p102 = scmp.ne.s32.totalorder %s90, %s91
      %p103 = scmp.eq.s32.totalorder %s25, 1
      %p104 = por %p102, %p103
      %p106 = scmp.ne.s32.totalorder %s91, %s105
      %p107 = scmp.eq.s32.totalorder %s25, 0
      %p108 = por %p106, %p107
      %s110 = sadd.s32 %s109, 1
      %p113 = scmp.eq.s32.totalorder %s19, 1
      %p114 = scmp.ne.s32.totalorder %s109, %s111
      %p115 = scmp.eq.s32.totalorder %s19, 0
      %p116 = por %p114, %p115
      %p117 = scmp.ne.s32.totalorder %s109, %s111
      %p118 = scmp.eq.s32.totalorder %s24, 1
      %p119 = por %p117, %p118
      %p120 = scmp.ne.s32.totalorder %s111, %s112
      %p121 = scmp.eq.s32.totalorder %s24, 0
      %p122 = por %p120, %p121
      %p123 = scmp.ne.s32.totalorder %s111, %s112
      %p124 = scmp.eq.s32.totalorder %s25, 1
      %p125 = por %p123, %p124
      %p127 = scmp.ne.s32.totalorder %s112, %s126
      %p128 = scmp.eq.s32.totalorder %s25, 0
      %p129 = por %p127, %p128
      %s131 = sadd.s32 %s130, 1
      %p134 = scmp.eq.s32.totalorder %s19, 1
      %p135 = scmp.ne.s32.totalorder %s130, %s132
      %p136 = scmp.eq.s32.totalorder %s19, 0
      %p137 = por %p135, %p136
      %p138 = scmp.ne.s32.totalorder %s130, %s132
      %p139 = scmp.eq.s32.totalorder %s24, 1
      %p140 = por %p138, %p139
      %p141 = scmp.ne.s32.totalorder %s132, %s133
      %p142 = scmp.eq.s32.totalorder %s24, 0
      %p143 = por %p141, %p142
      %p144 = scmp.ne.s32.totalorder %s132, %s133
      %p145 = scmp.eq.s32.totalorder %s25, 1
      %p146 = por %p144, %p145
      %p148 = scmp.ne.s32.totalorder %s133, %s147
      %p149 = scmp.eq.s32.totalorder %s25, 0
      %p150 = por %p148, %p149
      %s151 = ssub.s32 %s26, %s38
      %p152 = scmp.eq.s32.totalorder %s151, 0
      %s154 = sadd.s32 %s153, 1
      %s155 = scalar_select %p152, %s153, %s154
      %p158 = pneg %p152
      %p159 = scmp.eq.s32.totalorder %s19, 1
      %p160 = por %p158, %p159
      %p161 = scmp.ne.s32.totalorder %s153, %s156
      %p162 = scmp.eq.s32.totalorder %s19, 0
      %p163 = por %p161, %p162
      %p164 = scmp.ne.s32.totalorder %s153, %s156
      %p165 = scmp.eq.s32.totalorder %s24, 1
      %p166 = por %p164, %p165
      %p167 = scmp.ne.s32.totalorder %s156, %s157
      %p168 = scmp.eq.s32.totalorder %s24, 0
      %p169 = por %p167, %p168
      %p170 = scmp.ne.s32.totalorder %s156, %s157
      %p171 = scmp.eq.s32.totalorder %s25, 1
      %p172 = por %p170, %p171
      %p174 = scmp.ne.s32.totalorder %s157, %s173
      %p175 = scmp.eq.s32.totalorder %s25, 0
      %p176 = por %p174, %p175
      %s177 = ssub.s32 %s26, %s38
      %p178 = scmp.eq.s32.totalorder %s177, 0
      %s180 = sadd.s32 %s179, 1
      %s181 = scalar_select %p178, %s179, %s180
      %p184 = pneg %p178
      %p185 = scmp.eq.s32.totalorder %s19, 1
      %p186 = por %p184, %p185
      %p187 = scmp.ne.s32.totalorder %s179, %s182
      %p188 = scmp.eq.s32.totalorder %s19, 0
      %p189 = por %p187, %p188
      %p190 = scmp.ne.s32.totalorder %s179, %s182
      %p191 = scmp.eq.s32.totalorder %s24, 1
      %p192 = por %p190, %p191
      %p193 = scmp.ne.s32.totalorder %s182, %s183
      %p194 = scmp.eq.s32.totalorder %s24, 0
      %p195 = por %p193, %p194
      %p196 = scmp.ne.s32.totalorder %s182, %s183
      %p197 = scmp.eq.s32.totalorder %s25, 1
      %p198 = por %p196, %p197
      %p200 = scmp.ne.s32.totalorder %s183, %s199
      %p201 = scmp.eq.s32.totalorder %s25, 0
      %p202 = por %p200, %p201
      %p203 = scmp.le.s32.totalorder 1, %s19
      %p204 = scmp.lt.s32.totalorder %s19, 3
      %p205 = pnand %p203, %p204
      %p206 = pneg %p205
      // Predicated region
      $region9: #{tpu_custom_call.1} parent=5 // pred_check
        _
      $region10: #{tpu_custom_call.1} parent=5 // pred_check_branch
        %208 = sbr.rel (%p205) target = $region12
      $region11: #{tpu_custom_call.1} parent=5 // pred_region
        %s209 = ssub.s32 %s19, 1
        // Predicated region
        $region13: #{tpu_custom_call.1} parent=11 // pred_check
          %p210 = pneg %p80
        $region14: #{tpu_custom_call.1} parent=11 // pred_check_branch
          %212 = sbr.rel (%p210) target = $region16
        $region15: #{tpu_custom_call.1} parent=11 // pred_region
          _
        $region16: #{tpu_custom_call.1} parent=11 // pred_fallthru
          _
        // Predicated region
        $region17: #{tpu_custom_call.1} parent=11 // pred_check
          %p213 = pneg %p101
        $region18: #{tpu_custom_call.1} parent=11 // pred_check_branch
          %215 = sbr.rel (%p213) target = $region20
        $region19: #{tpu_custom_call.1} parent=11 // pred_region
          _
        $region20: #{tpu_custom_call.1} parent=11 // pred_fallthru
          _
        // Predicated region
        $region21: #{tpu_custom_call.1} parent=11 // pred_check
          %p216 = pneg %p122
        $region22: #{tpu_custom_call.1} parent=11 // pred_check_branch
          %218 = sbr.rel (%p216) target = $region24
        $region23: #{tpu_custom_call.1} parent=11 // pred_region
          _
        $region24: #{tpu_custom_call.1} parent=11 // pred_fallthru
          _
        // Predicated region
        $region25: #{tpu_custom_call.1} parent=11 // pred_check
          %p219 = pneg %p143
        $region26: #{tpu_custom_call.1} parent=11 // pred_check_branch
          %221 = sbr.rel (%p219) target = $region28
        $region27: #{tpu_custom_call.1} parent=11 // pred_region
          _
        $region28: #{tpu_custom_call.1} parent=11 // pred_fallthru
          _
      $region12: #{tpu_custom_call.1} parent=5 // pred_fallthru
        _
      %p222 = scmp.lt.s32.totalorder %s19, 2
      // Predicated region
      $region29: #{tpu_custom_call.1} parent=5 // pred_check
        %p223 = pneg %p222
      $region30: #{tpu_custom_call.1} parent=5 // pred_check_branch
        %225 = sbr.rel (%p223) target = $region32
      $region31: #{tpu_custom_call.1} parent=5 // pred_region
        // Predicated region
        $region33: #{tpu_custom_call.1} parent=31 // pred_check
          %p226 = pneg %p53
        $region34: #{tpu_custom_call.1} parent=31 // pred_check_branch
          %228 = sbr.rel (%p226) target = $region36
        $region35: #{tpu_custom_call.1} parent=31 // pred_region
          %s229 = smul.u32 32, %s27
          %p230 = scmp.lt.s32.totalorder %s26, 1
          %s231 = scalar_select %p230, %s26, 1
          %p232 = scmp.lt.s32.totalorder %s229, 31
          %s233 = scalar_select %p232, %s229, 31
          %s234 = smul.addr %s231, 32
          %s235 = sadd.s32 %s233, %s234
          %s236 = smul.addr %s235, 8
          %s237 = scalar_lea.vmem %s0, %s236
          %s238 = smul.u32 32, %s27
        $region36: #{tpu_custom_call.1} parent=31 // pred_fallthru
          _
      $region32: #{tpu_custom_call.1} parent=5 // pred_fallthru
        _
      %p239 = scmp.le.s32.totalorder 1, %s19
      %p240 = scmp.lt.s32.totalorder %s19, 3
      %p241 = pnand %p239, %p240
      %p242 = pneg %p241
      // Predicated region
      $region37: #{tpu_custom_call.1} parent=5 // pred_check
        _
      $region38: #{tpu_custom_call.1} parent=5 // pred_check_branch
        %244 = sbr.rel (%p241) target = $region40
      $region39: #{tpu_custom_call.1} parent=5 // pred_region
        %s245 = ssub.s32 %s19, 1
        %s246 = smul.u32 32, %s29
        %p247 = scmp.lt.s32.totalorder %s28, 1
        %s248 = scalar_select %p247, %s28, 1
        %p249 = scmp.lt.s32.totalorder %s246, 31
        %s250 = scalar_select %p249, %s246, 31
        %s251 = smul.addr %s248, 32
        %s252 = sadd.s32 %s250, %s251
        %s253 = smul.addr %s252, 8
        %s254 = scalar_lea.vmem %s0, %s253
        %p255 = pneg %p59
        %p256 = pneg %p56
        %p257 = pneg %p80
        %p258 = pneg %p77
        %p259 = pneg %p101
        %p260 = pneg %p98
        %p261 = pneg %p122
        %p262 = pneg %p119
        %p263 = pneg %p143
        %p264 = pneg %p140
        %p265 = pneg %p169
        %p266 = pneg %p166
        %s267 = sand.u32 %s156, 1
        %s268 = scalar_lea.sflag [#allocation5], %s267
        %s269 = sand.u32 %s156, 1
        %s270 = scalar_lea.vmem [#allocation4], %s269
        %p271 = pneg %p195
        %p272 = pneg %p192
        %s273 = sand.u32 %s182, 1
        %s274 = scalar_lea.sflag [#allocation7], %s273
        %s275 = sand.u32 %s182, 1
        %s276 = scalar_lea.vmem [#allocation6], %s275
        %s277 = smul.u32 32, %s29
        %p278 = scmp.lt.s32.totalorder %s28, 1
        %s279 = scalar_select %p278, %s28, 1
        %p280 = scmp.lt.s32.totalorder %s277, 31
        %s281 = scalar_select %p280, %s277, 31
        %s282 = smul.addr %s279, 32
        %s283 = sadd.s32 %s281, %s282
        %s284 = smul.addr %s283, 8
        %s285 = scalar_lea.vmem %s0, %s284
        %s286 = smul.u32 32, %s29
        %p287 = scmp.eq.s32.totalorder %s29, 0
        // Predicated region
        $region41: #{tpu_custom_call.1} parent=39 // pred_check
          %p288 = pneg %p287
        $region42: #{tpu_custom_call.1} parent=39 // pred_check_branch
          %290 = sbr.rel (%p288) target = $region44
        $region43: #{tpu_custom_call.1} parent=39 // pred_region
          %vm291 = vcmask 253952
          %292 = vst.msk [vmem:[#allocation2] sm:$0x1] %vm291, 0.0
          %293 = vst.msk [vmem:[#allocation3] sm:$0x1] %vm291, 0.0
        $region44: #{tpu_custom_call.1} parent=39 // pred_fallthru
          _
        %v294 = vld [vmem:[%s285] sm:$0xff]
        %v295 = vld [vmem:[%s285 + $0x8] sm:$0xff]
        %v296 = vld [vmem:[%s285 + $0x10] sm:$0xff]
        %v297 = vld [vmem:[%s285 + $0x18] sm:$0xff]
        %v298 = vld [vmem:[%s285 + $0x20] sm:$0xff]
        %v299 = vld [vmem:[%s285 + $0x28] sm:$0xff]
        %v300 = vld [vmem:[%s285 + $0x30] sm:$0xff]
        %v301 = vld [vmem:[%s285 + $0x38] sm:$0xff]
        %v302 = vld [vmem:[%s285 + $0x40] sm:$0xff]
        %v303 = vld [vmem:[%s285 + $0x48] sm:$0xff]
        %v304 = vld [vmem:[%s285 + $0x50] sm:$0xff]
        %v305 = vld [vmem:[%s285 + $0x58] sm:$0xff]
        %v306 = vld [vmem:[%s285 + $0x60] sm:$0xff]
        %v307 = vld [vmem:[%s285 + $0x68] sm:$0xff]
        %v308 = vld [vmem:[%s285 + $0x70] sm:$0xff]
        %v309 = vld [vmem:[%s285 + $0x78] sm:$0xff]
        %v310 = vld [vmem:[%s285 + $0x80] sm:$0xff]
        %v311 = vld [vmem:[%s285 + $0x88] sm:$0xff]
        %v312 = vld [vmem:[%s285 + $0x90] sm:$0xff]
        %v313 = vld [vmem:[%s285 + $0x98] sm:$0xff]
        %v314 = vld [vmem:[%s285 + $0xa0] sm:$0xff]
        %v315 = vld [vmem:[%s285 + $0xa8] sm:$0xff]
        %v316 = vld [vmem:[%s285 + $0xb0] sm:$0xff]
        %v317 = vld [vmem:[%s285 + $0xb8] sm:$0xff]
        %v318 = vld [vmem:[%s285 + $0xc0] sm:$0xff]
        %v319 = vld [vmem:[%s285 + $0xc8] sm:$0xff]
        %v320 = vld [vmem:[%s285 + $0xd0] sm:$0xff]
        %v321 = vld [vmem:[%s285 + $0xd8] sm:$0xff]
        %v322 = vld [vmem:[%s285 + $0xe0] sm:$0xff]
        %v323 = vld [vmem:[%s285 + $0xe8] sm:$0xff]
        %v324 = vld [vmem:[%s285 + $0xf0] sm:$0xff]
        %v325 = vld [vmem:[%s285 + $0xf8] sm:$0xff]
        %v326 = vld [vmem:[#allocation2] sm:$0x1]
        %vm327 = vcmask 261120
        %v328 = vsel %vm327, %v294, 0.0
        %v329 = vsel %vm327, %v295, 0.0
        %v330 = vadd.f32 %v328, %v329
        %v331 = vsel %vm327, %v296, 0.0
        %v332 = vadd.f32 %v330, %v331
        %v333 = vsel %vm327, %v297, 0.0
        %v334 = vadd.f32 %v332, %v333
        %v335 = vsel %vm327, %v298, 0.0
        %v336 = vadd.f32 %v334, %v335
        %v337 = vsel %vm327, %v299, 0.0
        %v338 = vadd.f32 %v336, %v337
        %v339 = vsel %vm327, %v300, 0.0
        %v340 = vadd.f32 %v338, %v339
        %v341 = vsel %vm327, %v301, 0.0
        %v342 = vadd.f32 %v340, %v341
        %v343 = vsel %vm327, %v302, 0.0
        %v344 = vadd.f32 %v342, %v343
        %v345 = vsel %vm327, %v303, 0.0
        %v346 = vadd.f32 %v344, %v345
        %v347 = vsel %vm327, %v304, 0.0
        %v348 = vadd.f32 %v346, %v347
        %v349 = vsel %vm327, %v305, 0.0
        %v350 = vadd.f32 %v348, %v349
        %v351 = vsel %vm327, %v306, 0.0
        %v352 = vadd.f32 %v350, %v351
        %v353 = vsel %vm327, %v307, 0.0
        %v354 = vadd.f32 %v352, %v353
        %v355 = vsel %vm327, %v308, 0.0
        %v356 = vadd.f32 %v354, %v355
        %v357 = vsel %vm327, %v309, 0.0
        %v358 = vadd.f32 %v356, %v357
        %v359 = vsel %vm327, %v310, 0.0
        %v360 = vadd.f32 %v358, %v359
        %v361 = vsel %vm327, %v311, 0.0
        %v362 = vadd.f32 %v360, %v361
        %v363 = vsel %vm327, %v312, 0.0
        %v364 = vadd.f32 %v362, %v363
        %v365 = vsel %vm327, %v313, 0.0
        %v366 = vadd.f32 %v364, %v365
        %v367 = vsel %vm327, %v314, 0.0
        %v368 = vadd.f32 %v366, %v367
        %v369 = vsel %vm327, %v315, 0.0
        %v370 = vadd.f32 %v368, %v369
        %v371 = vsel %vm327, %v316, 0.0
        %v372 = vadd.f32 %v370, %v371
        %v373 = vsel %vm327, %v317, 0.0
        %v374 = vadd.f32 %v372, %v373
        %v375 = vsel %vm327, %v318, 0.0
        %v376 = vadd.f32 %v374, %v375
        %v377 = vsel %vm327, %v319, 0.0
        %v378 = vadd.f32 %v376, %v377
        %v379 = vsel %vm327, %v320, 0.0
        %v380 = vadd.f32 %v378, %v379
        %v381 = vsel %vm327, %v321, 0.0
        %v382 = vadd.f32 %v380, %v381
        %v383 = vsel %vm327, %v322, 0.0
        %v384 = vadd.f32 %v382, %v383
        %v385 = vsel %vm327, %v323, 0.0
        %v386 = vadd.f32 %v384, %v385
        %v387 = vsel %vm327, %v324, 0.0
        %v388 = vadd.f32 %v386, %v387
        %v389 = vsel %vm327, %v325, 0.0
        %v390 = vadd.f32 %v388, %v389
        %v391 = vrot.slane %v390, 4
        %v392 = vadd.f32 %v390, %v391
        %v393 = vrot.slane %v392, 2
        %v394 = vadd.f32 %v392, %v393
        %v395 = vrot.slane %v394, 1
        %v396 = vadd.f32 %v394, %v395
        %v397 = vadd.f32 %v326, %v396
        %vm398 = vcmask 253952
        %399 = vst.msk [vmem:[#allocation2] sm:$0x1] %vm398, %v397
        %v400 = vld [vmem:[#allocation3] sm:$0x1]
        %v401 = vmul.f32 %v294, %v294
        %v402 = vmul.f32 %v295, %v295
        %v403 = vmul.f32 %v296, %v296
        %v404 = vmul.f32 %v297, %v297
        %v405 = vmul.f32 %v298, %v298
        %v406 = vmul.f32 %v299, %v299
        %v407 = vmul.f32 %v300, %v300
        %v408 = vmul.f32 %v301, %v301
        %v409 = vmul.f32 %v302, %v302
        %v410 = vmul.f32 %v303, %v303
        %v411 = vmul.f32 %v304, %v304
        %v412 = vmul.f32 %v305, %v305
        %v413 = vmul.f32 %v306, %v306
        %v414 = vmul.f32 %v307, %v307
        %v415 = vmul.f32 %v308, %v308
        %v416 = vmul.f32 %v309, %v309
        %v417 = vmul.f32 %v310, %v310
        %v418 = vmul.f32 %v311, %v311
        %v419 = vmul.f32 %v312, %v312
        %v420 = vmul.f32 %v313, %v313
        %v421 = vmul.f32 %v314, %v314
        %v422 = vmul.f32 %v315, %v315
        %v423 = vmul.f32 %v316, %v316
        %v424 = vmul.f32 %v317, %v317
        %v425 = vmul.f32 %v318, %v318
        %v426 = vmul.f32 %v319, %v319
        %v427 = vmul.f32 %v320, %v320
        %v428 = vmul.f32 %v321, %v321
        %v429 = vmul.f32 %v322, %v322
        %v430 = vmul.f32 %v323, %v323
        %v431 = vmul.f32 %v324, %v324
        %v432 = vmul.f32 %v325, %v325
        %v433 = vsel %vm327, %v401, 0.0
        %v434 = vsel %vm327, %v402, 0.0
        %v435 = vadd.f32 %v433, %v434
        %v436 = vsel %vm327, %v403, 0.0
        %v437 = vadd.f32 %v435, %v436
        %v438 = vsel %vm327, %v404, 0.0
        %v439 = vadd.f32 %v437, %v438
        %v440 = vsel %vm327, %v405, 0.0
        %v441 = vadd.f32 %v439, %v440
        %v442 = vsel %vm327, %v406, 0.0
        %v443 = vadd.f32 %v441, %v442
        %v444 = vsel %vm327, %v407, 0.0
        %v445 = vadd.f32 %v443, %v444
        %v446 = vsel %vm327, %v408, 0.0
        %v447 = vadd.f32 %v445, %v446
        %v448 = vsel %vm327, %v409, 0.0
        %v449 = vadd.f32 %v447, %v448
        %v450 = vsel %vm327, %v410, 0.0
        %v451 = vadd.f32 %v449, %v450
        %v452 = vsel %vm327, %v411, 0.0
        %v453 = vadd.f32 %v451, %v452
        %v454 = vsel %vm327, %v412, 0.0
        %v455 = vadd.f32 %v453, %v454
        %v456 = vsel %vm327, %v413, 0.0
        %v457 = vadd.f32 %v455, %v456
        %v458 = vsel %vm327, %v414, 0.0
        %v459 = vadd.f32 %v457, %v458
        %v460 = vsel %vm327, %v415, 0.0
        %v461 = vadd.f32 %v459, %v460
        %v462 = vsel %vm327, %v416, 0.0
        %v463 = vadd.f32 %v461, %v462
        %v464 = vsel %vm327, %v417, 0.0
        %v465 = vadd.f32 %v463, %v464
        %v466 = vsel %vm327, %v418, 0.0
        %v467 = vadd.f32 %v465, %v466
        %v468 = vsel %vm327, %v419, 0.0
        %v469 = vadd.f32 %v467, %v468
        %v470 = vsel %vm327, %v420, 0.0
        %v471 = vadd.f32 %v469, %v470
        %v472 = vsel %vm327, %v421, 0.0
        %v473 = vadd.f32 %v471, %v472
        %v474 = vsel %vm327, %v422, 0.0
        %v475 = vadd.f32 %v473, %v474
        %v476 = vsel %vm327, %v423, 0.0
        %v477 = vadd.f32 %v475, %v476
        %v478 = vsel %vm327, %v424, 0.0
        %v479 = vadd.f32 %v477, %v478
        %v480 = vsel %vm327, %v425, 0.0
        %v481 = vadd.f32 %v479, %v480
        %v482 = vsel %vm327, %v426, 0.0
        %v483 = vadd.f32 %v481, %v482
        %v484 = vsel %vm327, %v427, 0.0
        %v485 = vadd.f32 %v483, %v484
        %v486 = vsel %vm327, %v428, 0.0
        %v487 = vadd.f32 %v485, %v486
        %v488 = vsel %vm327, %v429, 0.0
        %v489 = vadd.f32 %v487, %v488
        %v490 = vsel %vm327, %v430, 0.0
        %v491 = vadd.f32 %v489, %v490
        %v492 = vsel %vm327, %v431, 0.0
        %v493 = vadd.f32 %v491, %v492
        %v494 = vsel %vm327, %v432, 0.0
        %v495 = vadd.f32 %v493, %v494
        %v496 = vrot.slane %v495, 4
        %v497 = vadd.f32 %v495, %v496
        %v498 = vrot.slane %v497, 2
        %v499 = vadd.f32 %v497, %v498
        %v500 = vrot.slane %v499, 1
        %v501 = vadd.f32 %v499, %v500
        %v502 = vadd.f32 %v400, %v501
        %503 = vst.msk [vmem:[#allocation3] sm:$0x1] %vm398, %v502
        // Predicated region
        $region45: #{tpu_custom_call.1} parent=39 // pred_check
          %p504 = pneg %p287
        $region46: #{tpu_custom_call.1} parent=39 // pred_check_branch
          %506 = sbr.rel (%p504) target = $region48
        $region47: #{tpu_custom_call.1} parent=39 // pred_region
          %v507 = vld [vmem:[%s1] sm:$0xff]
          %v508 = vld [vmem:[%s1 + $0x8] sm:$0xff]
          %v509 = vld [vmem:[%s1 + $0x10] sm:$0xff]
          %v510 = vld [vmem:[%s1 + $0x18] sm:$0xff]
          %v511 = vld [vmem:[%s2] sm:$0xff]
          %v512 = vld [vmem:[%s2 + $0x8] sm:$0xff]
          %v513 = vld [vmem:[#allocation2] sm:$0x1]
          %v515 = vsel %vm327, %v513, 0
          %517 = vmatpush.msra.mxu0 0.0
          %518 = vmatpush.msra.mxu0 0.0
          %519 = vmatpush.msra.mxu0 0.0
          %520 = vmatpush.msra.mxu0 0.0
          %521 = vmatpush.msra.mxu0 0.0
          %522 = vmatpush.msra.mxu0 0.0
          %523 = vmatpush.msra.mxu0 0.0
          %524 = vmatpush.msra.mxu0 0.0
          %525 = vmatpush.msra.mxu0 0.0
          %526 = vmatpush.msra.mxu0 0.0
          %527 = vmatpush.msra.mxu0 0.0
          %528 = vmatpush.msra.mxu0 0.0
          %529 = vmatpush.msra.mxu0 %v510
          %530 = vmatpush.msra.mxu0 %v509
          %531 = vmatpush.msra.mxu0 %v508
          %532 = vmatpush.msra.mxu0 %v507
          %533 = vmatmul.f32.gmra.mxu0 %v515
          %v534 = vpop.f32.mrf.mxu0
          %v535 = vadd.f32 0.0, %v534
          %536 = vdwg.mxu0
          %v537 = vld [vmem:[#allocation3] sm:$0x1]
          %v539 = vsel %vm327, %v537, 0
          %541 = vmatpush.msra.mxu0 0.0
          %542 = vmatpush.msra.mxu0 0.0
          %543 = vmatpush.msra.mxu0 0.0
          %544 = vmatpush.msra.mxu0 0.0
          %545 = vmatpush.msra.mxu0 0.0
          %546 = vmatpush.msra.mxu0 0.0
          %547 = vmatpush.msra.mxu0 0.0
          %548 = vmatpush.msra.mxu0 0.0
          %549 = vmatpush.msra.mxu0 0.0
          %550 = vmatpush.msra.mxu0 0.0
          %551 = vmatpush.msra.mxu0 0.0
          %552 = vmatpush.msra.mxu0 0.0
          %553 = vmatpush.msra.mxu0 %v510
          %554 = vmatpush.msra.mxu0 %v509
          %555 = vmatpush.msra.mxu0 %v508
          %556 = vmatpush.msra.mxu0 %v507
          %557 = vmatmul.f32.gmra.mxu0 %v539
          %v558 = vpop.f32.mrf.mxu0
          %v559 = vadd.f32 0.0, %v558
          %560 = vdwg.mxu0
          %v561 = vrcp.pop 512.0
          %v562 = vmul.f32 512.0, %v561
          %v563 = vsub.f32 1.0, %v562
          %v564 = vmul.f32 %v561, %v563
          %v565 = vadd.f32 %v561, %v564
          %vm566 = vweird.f32 %v561
          %v567 = vsel %vm566, %v561, %v565
          %v568 = vmul.f32 %v535, %v567
          %v569 = vmul.f32 %v559, %v567
          %v570 = vmul.f32 %v568, %v568
          %v571 = vsub.f32 %v569, %v570
          %v572 = vmax.f32 %v571, 0.0
          %v573 = vadd.f32 %v572, 1e-06
          %v574 = vrsqrt.pop %v573
          %v575 = vmul.f32 %v574, %v573
          %v576 = vmul.f32 %v575, %v574
          %v577 = vmul.f32 0.5, %v576
          %v578 = vsub.f32 1.5, %v577
          %v579 = vmul.f32 %v574, %v578
          %vm580 = vweird.f32 %v573
          %vm581 = vweird.f32 %v574
          %vm582 = vmor %vm580, %vm581
          %v583 = vsel %vm582, %v574, %v579
          %vm584 = vcmask 130048
          %v586 = vsel %vm584, %v568, 0
          %588 = vmatpush.msra.mxu0 0.0
          %589 = vmatpush.msra.mxu0 0.0
          %590 = vmatpush.msra.mxu0 0.0
          %591 = vmatpush.msra.mxu0 0.0
          %592 = vmatpush.msra.mxu0 0.0
          %593 = vmatpush.msra.mxu0 0.0
          %594 = vmatpush.msra.mxu0 0.0
          %595 = vmatpush.msra.mxu0 0.0
          %596 = vmatpush.msra.mxu0 0.0
          %597 = vmatpush.msra.mxu0 0.0
          %598 = vmatpush.msra.mxu0 0.0
          %599 = vmatpush.msra.mxu0 0.0
          %600 = vmatpush.msra.mxu0 0.0
          %601 = vmatpush.msra.mxu0 0.0
          %602 = vmatpush.msra.mxu0 %v512
          %603 = vmatpush.msra.mxu0 %v511
          %604 = vmatmul.f32.gmra.mxu0 %v586
          %v605 = vpop.f32.mrf.mxu0
          %v606 = vadd.f32 0.0, %v605
          %607 = vdwg.mxu0
          %v609 = vsel %vm584, %v583, 0
          %611 = vmatpush.msra.mxu0 0.0
          %612 = vmatpush.msra.mxu0 0.0
          %613 = vmatpush.msra.mxu0 0.0
          %614 = vmatpush.msra.mxu0 0.0
          %615 = vmatpush.msra.mxu0 0.0
          %616 = vmatpush.msra.mxu0 0.0
          %617 = vmatpush.msra.mxu0 0.0
          %618 = vmatpush.msra.mxu0 0.0
          %619 = vmatpush.msra.mxu0 0.0
          %620 = vmatpush.msra.mxu0 0.0
          %621 = vmatpush.msra.mxu0 0.0
          %622 = vmatpush.msra.mxu0 0.0
          %623 = vmatpush.msra.mxu0 0.0
          %624 = vmatpush.msra.mxu0 0.0
          %625 = vmatpush.msra.mxu0 %v512
          %626 = vmatpush.msra.mxu0 %v511
          %627 = vmatmul.f32.gmra.mxu0 %v609
          %v628 = vpop.f32.mrf.mxu0
          %v629 = vadd.f32 0.0, %v628
          %630 = vdwg.mxu0
          %v631 = vld [vmem:[%s3] sm:$0x1]
          %v632 = vmul.f32 %v629, %v631
          %633 = vst.msk [vmem:[%s270] sm:$0x1] %vm398, %v632
          %v634 = vld [vmem:[%s4] sm:$0x1]
          %v635 = vmul.f32 %v606, %v632
          %v636 = vsub.f32 %v634, %v635
          %637 = vst.msk [vmem:[%s276] sm:$0x1] %vm398, %v636
        $region48: #{tpu_custom_call.1} parent=39 // pred_fallthru
          _
        %s638 = sand.u32 %s156, 1
        %s639 = scalar_lea.sflag [#allocation5], %s638
        %s640 = sand.u32 %s156, 1
        %s641 = scalar_lea.vmem [#allocation4], %s640
        %s642 = sand.u32 %s182, 1
        %s643 = scalar_lea.sflag [#allocation7], %s642
        %s644 = sand.u32 %s182, 1
        %s645 = scalar_lea.vmem [#allocation6], %s644
        // Predicated region
        $region49: #{tpu_custom_call.1} parent=39 // pred_check
          %p646 = pneg %p166
        $region50: #{tpu_custom_call.1} parent=39 // pred_check_branch
          %648 = sbr.rel (%p646) target = $region52
        $region51: #{tpu_custom_call.1} parent=39 // pred_region
          %650 = vsyncadd %s639, 0
          %s651 = scalar_lea.hbm %s5, %s28
          %s653 = sshll.u32 %s641, 4
          %s654 = int_to_ptr.vmem [resolvable:$true] %s653
          %s655 = sshll.u32 %s651, 4
          %s656 = int_to_ptr.hbm [resolvable:$true] %s655
          %658 = dma.vmem_to_hbm [thread:$0]  %s654, 16, %s656, %s639
        $region52: #{tpu_custom_call.1} parent=39 // pred_fallthru
          _
        // Predicated region
        $region53: #{tpu_custom_call.1} parent=39 // pred_check
          %p659 = pneg %p192
        $region54: #{tpu_custom_call.1} parent=39 // pred_check_branch
          %661 = sbr.rel (%p659) target = $region56
        $region55: #{tpu_custom_call.1} parent=39 // pred_region
          %663 = vsyncadd %s643, 0
          %s664 = scalar_lea.hbm %s6, %s28
          %s666 = sshll.u32 %s645, 4
          %s667 = int_to_ptr.vmem [resolvable:$true] %s666
          %s668 = sshll.u32 %s664, 4
          %s669 = int_to_ptr.hbm [resolvable:$true] %s668
          %671 = dma.vmem_to_hbm [thread:$0]  %s667, 16, %s669, %s643
        $region56: #{tpu_custom_call.1} parent=39 // pred_fallthru
          _
      $region40: #{tpu_custom_call.1} parent=5 // pred_fallthru
        _
      %p672 = scmp.le.s32.totalorder 2, %s19
      // Predicated region
      $region57: #{tpu_custom_call.1} parent=5 // pred_check
        %p673 = pneg %p672
      $region58: #{tpu_custom_call.1} parent=5 // pred_check_branch
        %675 = sbr.rel (%p673) target = $region60
      $region59: #{tpu_custom_call.1} parent=5 // pred_region
        %s676 = ssub.s32 %s19, 2
        // Predicated region
        $region61: #{tpu_custom_call.1} parent=59 // pred_check
          %p677 = pneg %p172
        $region62: #{tpu_custom_call.1} parent=59 // pred_check_branch
          %679 = sbr.rel (%p677) target = $region64
        $region63: #{tpu_custom_call.1} parent=59 // pred_region
          %s680 = sand.u32 %s157, 1
          %s681 = scalar_lea.sflag [#allocation5], %s680
          %s682 = sand.u32 %s157, 1
          %s683 = scalar_lea.vmem [#allocation4], %s682
          %685 = dma.done %s681, 16
        $region64: #{tpu_custom_call.1} parent=59 // pred_fallthru
          _
        // Predicated region
        $region65: #{tpu_custom_call.1} parent=59 // pred_check
          %p686 = pneg %p198
        $region66: #{tpu_custom_call.1} parent=59 // pred_check_branch
          %688 = sbr.rel (%p686) target = $region68
        $region67: #{tpu_custom_call.1} parent=59 // pred_region
          %s689 = sand.u32 %s183, 1
          %s690 = scalar_lea.sflag [#allocation7], %s689
          %s691 = sand.u32 %s183, 1
          %s692 = scalar_lea.vmem [#allocation6], %s691
          %694 = dma.done %s690, 16
        $region68: #{tpu_custom_call.1} parent=59 // pred_fallthru
          _
      $region60: #{tpu_custom_call.1} parent=5 // pred_fallthru
        _
    $region6: #{tpu_custom_call.1} parent=1 // loop_footer
      %s23 = sadd.s32 1, %s19
    $region7: #{tpu_custom_call.1} parent=1 // loop_footer_branch
      %18 = sbr.rel target = $region3
    $region8: #{tpu_custom_call.1} parent=1 // loop_exit
      _
    %695 = vsyncpa [#allocation5], 1
    %s696 = scalar_lea.sflag [#allocation5], 1
    %697 = vsyncpa %s696, 1
    %698 = vsyncpa [#allocation7], 1
    %s699 = scalar_lea.sflag [#allocation7], 1
    %700 = vsyncpa %s699, 1

</llo_original>
